<compile_context>
chip_gen: v5e
topology: v5e:2x2
jax: 0.10.0
libtpu: 0.0.40
codegen_flags: <defaults>
</compile_context>

<pallas_src>
import jax
import jax.numpy as jnp
from jax.experimental import pallas as pl
from jax.experimental.pallas import tpu as pltpu

EPS = 1e-4


def _round_up(x, m):
    return ((x + m - 1) // m) * m


def _default_tile_n(M, D, N):
    """Pick a batch-tile size: large enough to amortize per-step overhead, small
    enough that double-buffered blocks stay well under the 32 MiB scoped VMEM."""
    d_pad = max(_round_up(D, 128), 128)          # lanes pad to 128
    budget = 8 * 1024 * 1024                     # bytes for double-buffered inputs
    per_row = 2 * (M * d_pad * 4 + 128 * 4)      # preds (f32-equivalent) + labels row
    tn = max(8, (budget // per_row) // 8 * 8)
    return int(min(tn, _round_up(N, 8), 1024))


def _make_cae_kernel(M, C, n_true, tile_n):
    inv_mn = 1.0 / float(M * n_true)
    inv_n = 1.0 / float(n_true)

    def kernel(labels_ref, *args):
        pred_refs = args[:M]                 # M x (TN, D) VMEM, native dtype
        mu_ref = args[M]                     # (C, D) VMEM, resident
        sigma_ref = args[M + 1]              # (C, D) VMEM, resident
        out_ref = args[M + 2]                # (1, 1) SMEM output
        acc_ref = args[M + 3]                # (2,)  SMEM scratch accumulator

        step = pl.program_id(0)

        @pl.when(step == 0)
        def _init():
            acc_ref[0] = 0.0
            acc_ref[1] = 0.0

        # Row-validity mask for the (possibly OOB) edge tile.
        rows = jax.lax.broadcasted_iota(jnp.int32, (tile_n, 1), 0) + step * tile_n
        valid = rows < n_true                                            # (TN, 1) bool

        # Exact one-hot gather of the per-class parameters for this tile.
        labels = labels_ref[...]                                         # (TN, 1) int32
        class_ids = jax.lax.broadcasted_iota(jnp.int32, (tile_n, C), 1)  # (TN, C)
        onehot = jnp.where(jnp.logical_and(valid, labels == class_ids),
                           1.0, 0.0).astype(jnp.float32)                 # (TN, C)

        # Per-class terms computed once per tile on the tiny (C, D) table.
        mu_t = mu_ref[...].astype(jnp.float32)                           # (C, D)
        sigma_t = sigma_ref[...].astype(jnp.float32)                     # (C, D)
        sigma2 = sigma_t * sigma_t
        inv_sigma2 = 1.0 / sigma2                                        # exact divide
        log_sigma2 = jnp.log(sigma2)

        hi = jax.lax.Precision.HIGHEST  # one-hot gather must be bit-faithful in f32
        mu_g = jnp.dot(onehot, mu_t, preferred_element_type=jnp.float32,
                       precision=hi)                                     # (TN, D)
        invs_g = jnp.dot(onehot, inv_sigma2, preferred_element_type=jnp.float32,
                         precision=hi)                                   # (TN, D)
        logs_g = jnp.dot(onehot, log_sigma2, preferred_element_type=jnp.float32,
                         precision=hi)                                   # (TN, D)

        # item1 partial: sum over predictors m, tile rows i, features d of diff^2/sigma^2
        item1_p = jnp.float32(0.0)
        for m in range(M):
            x = jnp.where(valid, pred_refs[m][...].astype(jnp.float32), 0.0)
            d = x - mu_g
            item1_p = item1_p + jnp.sum(d * d * invs_g)

        # item2 partial: sum over valid rows of log(prod_d sigma^2) = sum_d log(sigma^2)
        item2_p = jnp.sum(logs_g)

        acc_ref[0] = acc_ref[0] + item1_p
        acc_ref[1] = acc_ref[1] + item2_p

        @pl.when(step == pl.num_programs(0) - 1)
        def _finalize():
            out_ref[0, 0] = 0.5 * (acc_ref[0] * inv_mn + acc_ref[1] * inv_n)

    return kernel


def multiclass_cae_loss(preds_list, pseudo_label, mu_table, sigma_table, *, tile_n=None):
    """JAX wrapper. preds_list: list of M arrays (N, D); pseudo_label: (N,) int;
    mu_table/sigma_table: (C, D) class parameters (C == D == dim in the module)."""
    M = len(preds_list)
    N, D = preds_list[0].shape
    C = mu_table.shape[0]

    if tile_n is None:
        tile_n = _default_tile_n(M, D, N)
    tile_n = int(tile_n)
    n_tiles = pl.cdiv(N, tile_n)

    labels2d = jnp.asarray(pseudo_label, jnp.int32).reshape(N, 1)

    kernel = _make_cae_kernel(M, C, N, tile_n)

    in_specs = (
        [pl.BlockSpec((tile_n, 1), lambda i: (i, 0))]                       # labels
        + [pl.BlockSpec((tile_n, D), lambda i: (i, 0)) for _ in range(M)]   # preds_m
        + [pl.BlockSpec((C, D), lambda i: (0, 0)),                          # mu table
           pl.BlockSpec((C, D), lambda i: (0, 0))]                          # sigma table
    )

    out = pl.pallas_call(
        kernel,
        out_shape=jax.ShapeDtypeStruct((1, 1), jnp.float32),
        grid=(n_tiles,),
        in_specs=in_specs,
        out_specs=pl.BlockSpec(memory_space=pltpu.SMEM),
        scratch_shapes=[pltpu.SMEM((2,), jnp.float32)],
        compiler_params=pltpu.CompilerParams(
            dimension_semantics=("arbitrary",),   # grid axis carries the accumulator
            vmem_limit_bytes=32 * 1024 * 1024,
        ),
    )(labels2d, *preds_list, mu_table, sigma_table)
    return out[0, 0]


def reference_loss(preds_list, pseudo_label, mu_table, sigma_table):
    """Pure-JAX transliteration of MultiClassCaE.forward for verification."""
    preds = jnp.stack([p.astype(jnp.float32) for p in preds_list])   # (M, N, D)
    mu_g = mu_table[pseudo_label].astype(jnp.float32)                # (N, D)
    sigma_g = sigma_table[pseudo_label].astype(jnp.float32)          # (N, D)
    sigma2 = sigma_g ** 2
    diff = preds - mu_g[None]
    item1 = jnp.mean(jnp.sum(diff * (1.0 / sigma2)[None] * diff, axis=-1), axis=0)  # (N,)
    item2 = jnp.log(jnp.prod(sigma2, axis=-1))                                      # (N,)
    return jnp.mean(0.5 * (item1 + item2))


if __name__ == "__main__":
    dim = 8   # MultiClassCaE(dim): num_classes == feature dim == dim
    M = 4     # number of predictors in the list
    N = 20    # batch size (not a multiple of the tile -> exercises edge masking)

    key = jax.random.PRNGKey(0)
    k1, k2, k3, k4 = jax.random.split(key, 4)

    preds_list = [
        jax.random.normal(jax.random.fold_in(k1, m), (N, dim), jnp.float32)
        for m in range(M)
    ]
    pseudo_label = jax.random.randint(k2, (N,), 0, dim)

    # Parameters: SingleClassCaE has mu = zeros(dim), sigma = ones(dim) per class.
    # Perturbed so the math is non-trivial; sigma kept in the valid clip range
    # [Eps, 10000] as enforced by _reset().
    mu_table = 0.1 * jax.random.normal(k3, (dim, dim), jnp.float32)
    sigma_table = jnp.clip(
        1.0 + 0.1 * jax.random.normal(k4, (dim, dim), jnp.float32), EPS, 1e4
    )

    # tile_n=8 -> 3 grid steps (2 full tiles + 1 masked edge tile): exercises both the
    # cross-step accumulator and the validity masking.
    loss = multiclass_cae_loss(
        preds_list, pseudo_label, mu_table, sigma_table, tile_n=8
    )
    loss = jax.block_until_ready(loss)

    ref = reference_loss(preds_list, pseudo_label, mu_table, sigma_table)
    assert jnp.allclose(loss, ref, rtol=1e-4, atol=1e-4), (loss, ref)
    print("KERNEL_OK")
</pallas_src>

<mosaic_0001>
module attributes {stable_mosaic.version = 11 : i64} {
  func.func @kernel(%arg0: i32, %arg1: memref<8x1xi32, #tpu.memory_space<vmem>>, %arg2: memref<8x8xf32, #tpu.memory_space<vmem>>, %arg3: memref<8x8xf32, #tpu.memory_space<vmem>>, %arg4: memref<8x8xf32, #tpu.memory_space<vmem>>, %arg5: memref<8x8xf32, #tpu.memory_space<vmem>>, %arg6: memref<8x8xf32, #tpu.memory_space<vmem>>, %arg7: memref<8x8xf32, #tpu.memory_space<vmem>>, %arg8: memref<1x1xf32, #tpu.memory_space<smem>>, %arg9: memref<2xf32, #tpu.memory_space<smem>>) attributes {dimension_semantics = [#tpu.dimension_semantics<arbitrary>], iteration_bounds = array<i64: 3>, scalar_prefetch = 0 : i64, scratch_operands = 1 : i64, tpu.core_type = #tpu.core_type<tc>, window_params = [{transform_indices = @transform_0, window_bounds = array<i64: 8, 1>}, {transform_indices = @transform_1, window_bounds = array<i64: 8, 8>}, {transform_indices = @transform_2, window_bounds = array<i64: 8, 8>}, {transform_indices = @transform_3, window_bounds = array<i64: 8, 8>}, {transform_indices = @transform_4, window_bounds = array<i64: 8, 8>}, {pipeline_mode = #tpu.pipeline_mode<synchronous>, transform_indices = @transform_5, window_bounds = array<i64: 8, 8>}, {pipeline_mode = #tpu.pipeline_mode<synchronous>, transform_indices = @transform_6, window_bounds = array<i64: 8, 8>}, {transform_indices = @transform_7, window_bounds = array<i64: 1, 1>}]} {
    %c0_i32 = arith.constant 0 : i32
    %0 = arith.cmpi eq, %arg0, %c0_i32 : i32
    %1 = arith.extui %0 : i1 to i32
    %c0_i32_0 = arith.constant 0 : i32
    %2 = arith.cmpi ne, %1, %c0_i32_0 : i32
    scf.if %2 {
      %cst_33 = arith.constant 0.000000e+00 : f32
      %c0_34 = arith.constant 0 : index
      %92 = memref.load %arg9[%c0_34] : memref<2xf32, #tpu.memory_space<smem>>
      memref.store %cst_33, %arg9[%c0_34] : memref<2xf32, #tpu.memory_space<smem>>
      %cst_35 = arith.constant 0.000000e+00 : f32
      %c1_36 = arith.constant 1 : index
      %93 = memref.load %arg9[%c1_36] : memref<2xf32, #tpu.memory_space<smem>>
      memref.store %cst_35, %arg9[%c1_36] : memref<2xf32, #tpu.memory_space<smem>>
    } else {
    }
    %3 = tpu.iota {dimensions = array<i32: 0>} : vector<8x1xi32>
    %c8_i32 = arith.constant 8 : i32
    %4 = arith.muli %arg0, %c8_i32 : i32
    %5 = vector.broadcast %4 : i32 to vector<8x1xi32>
    %6 = arith.addi %3, %5 : vector<8x1xi32>
    %c20_i32 = arith.constant 20 : i32
    %7 = vector.broadcast %c20_i32 : i32 to vector<8x1xi32>
    %8 = arith.cmpi slt, %6, %7 : vector<8x1xi32>
    %c0 = arith.constant 0 : index
    %c0_1 = arith.constant 0 : index
    %9 = vector.load %arg1[%c0, %c0_1] : memref<8x1xi32, #tpu.memory_space<vmem>>, vector<8x1xi32>
    %10 = tpu.iota {dimensions = array<i32: 1>} : vector<8x8xi32>
    %11 = vector.broadcast %9 : vector<8x1xi32> to vector<8x8xi32>
    %12 = arith.cmpi eq, %11, %10 : vector<8x8xi32>
    %13 = vector.broadcast %8 : vector<8x1xi1> to vector<8x8xi1>
    %14 = arith.andi %13, %12 : vector<8x8xi1>
    %cst = arith.constant 1.000000e+00 : f32
    %cst_2 = arith.constant 0.000000e+00 : f32
    %15 = vector.broadcast %cst : f32 to vector<8x8xf32>
    %16 = vector.broadcast %cst_2 : f32 to vector<8x8xf32>
    %17 = arith.select %14, %15, %16 : vector<8x8xi1>, vector<8x8xf32>
    %c0_3 = arith.constant 0 : index
    %c0_4 = arith.constant 0 : index
    %18 = vector.load %arg6[%c0_3, %c0_4] : memref<8x8xf32, #tpu.memory_space<vmem>>, vector<8x8xf32>
    %c0_5 = arith.constant 0 : index
    %c0_6 = arith.constant 0 : index
    %19 = vector.load %arg7[%c0_5, %c0_6] : memref<8x8xf32, #tpu.memory_space<vmem>>, vector<8x8xf32>
    %20 = arith.mulf %19, %19 : vector<8x8xf32>
    %cst_7 = arith.constant 1.000000e+00 : f32
    %21 = vector.broadcast %cst_7 : f32 to vector<8x8xf32>
    %22 = arith.divf %21, %20 : vector<8x8xf32>
    %23 = math.log %20 : vector<8x8xf32>
    %cst_8 = arith.constant dense<0.000000e+00> : vector<8x8xf32>
    %24 = tpu.matmul %17, %18, %cst_8 {dimension_numbers = #tpu.dot_dimension_numbers<[1], [0], [0], [1], [0, 0, 1, 1], [], []>, precision = #tpu.contract_precision<fp32>} : vector<8x8xf32>, vector<8x8xf32>, vector<8x8xf32> -> vector<8x8xf32>
    %cst_9 = arith.constant dense<0.000000e+00> : vector<8x8xf32>
    %25 = tpu.matmul %17, %22, %cst_9 {dimension_numbers = #tpu.dot_dimension_numbers<[1], [0], [0], [1], [0, 0, 1, 1], [], []>, precision = #tpu.contract_precision<fp32>} : vector<8x8xf32>, vector<8x8xf32>, vector<8x8xf32> -> vector<8x8xf32>
    %cst_10 = arith.constant dense<0.000000e+00> : vector<8x8xf32>
    %26 = tpu.matmul %17, %23, %cst_10 {dimension_numbers = #tpu.dot_dimension_numbers<[1], [0], [0], [1], [0, 0, 1, 1], [], []>, precision = #tpu.contract_precision<fp32>} : vector<8x8xf32>, vector<8x8xf32>, vector<8x8xf32> -> vector<8x8xf32>
    %c0_11 = arith.constant 0 : index
    %c0_12 = arith.constant 0 : index
    %27 = vector.load %arg2[%c0_11, %c0_12] : memref<8x8xf32, #tpu.memory_space<vmem>>, vector<8x8xf32>
    %cst_13 = arith.constant 0.000000e+00 : f32
    %28 = vector.shape_cast %8 : vector<8x1xi1> to vector<8x1xi1>
    %29 = vector.broadcast %28 : vector<8x1xi1> to vector<8x8xi1>
    %30 = vector.broadcast %cst_13 : f32 to vector<8x8xf32>
    %31 = arith.select %29, %27, %30 : vector<8x8xi1>, vector<8x8xf32>
    %32 = arith.subf %31, %24 : vector<8x8xf32>
    %33 = arith.mulf %32, %32 : vector<8x8xf32>
    %34 = arith.mulf %33, %25 : vector<8x8xf32>
    %35 = vector.shape_cast %34 : vector<8x8xf32> to vector<1x8x8xf32>
    %cst_14 = arith.constant dense<0.000000e+00> : vector<1xf32>
    %36 = vector.multi_reduction <add>, %35, %cst_14 [1, 2] : vector<1x8x8xf32> to vector<1xf32>
    %37 = vector.shape_cast %36 : vector<1xf32> to vector<1x1x1xf32>
    %38 = vector.extract %37[0, 0, 0] : f32 from vector<1x1x1xf32>
    %cst_15 = arith.constant 0.000000e+00 : f32
    %39 = arith.addf %cst_15, %38 : f32
    %c0_16 = arith.constant 0 : index
    %c0_17 = arith.constant 0 : index
    %40 = vector.load %arg3[%c0_16, %c0_17] : memref<8x8xf32, #tpu.memory_space<vmem>>, vector<8x8xf32>
    %cst_18 = arith.constant 0.000000e+00 : f32
    %41 = vector.shape_cast %8 : vector<8x1xi1> to vector<8x1xi1>
    %42 = vector.broadcast %41 : vector<8x1xi1> to vector<8x8xi1>
    %43 = vector.broadcast %cst_18 : f32 to vector<8x8xf32>
    %44 = arith.select %42, %40, %43 : vector<8x8xi1>, vector<8x8xf32>
    %45 = arith.subf %44, %24 : vector<8x8xf32>
    %46 = arith.mulf %45, %45 : vector<8x8xf32>
    %47 = arith.mulf %46, %25 : vector<8x8xf32>
    %48 = vector.shape_cast %47 : vector<8x8xf32> to vector<1x8x8xf32>
    %cst_19 = arith.constant dense<0.000000e+00> : vector<1xf32>
    %49 = vector.multi_reduction <add>, %48, %cst_19 [1, 2] : vector<1x8x8xf32> to vector<1xf32>
    %50 = vector.shape_cast %49 : vector<1xf32> to vector<1x1x1xf32>
    %51 = vector.extract %50[0, 0, 0] : f32 from vector<1x1x1xf32>
    %52 = arith.addf %39, %51 : f32
    %c0_20 = arith.constant 0 : index
    %c0_21 = arith.constant 0 : index
    %53 = vector.load %arg4[%c0_20, %c0_21] : memref<8x8xf32, #tpu.memory_space<vmem>>, vector<8x8xf32>
    %cst_22 = arith.constant 0.000000e+00 : f32
    %54 = vector.shape_cast %8 : vector<8x1xi1> to vector<8x1xi1>
    %55 = vector.broadcast %54 : vector<8x1xi1> to vector<8x8xi1>
    %56 = vector.broadcast %cst_22 : f32 to vector<8x8xf32>
    %57 = arith.select %55, %53, %56 : vector<8x8xi1>, vector<8x8xf32>
    %58 = arith.subf %57, %24 : vector<8x8xf32>
    %59 = arith.mulf %58, %58 : vector<8x8xf32>
    %60 = arith.mulf %59, %25 : vector<8x8xf32>
    %61 = vector.shape_cast %60 : vector<8x8xf32> to vector<1x8x8xf32>
    %cst_23 = arith.constant dense<0.000000e+00> : vector<1xf32>
    %62 = vector.multi_reduction <add>, %61, %cst_23 [1, 2] : vector<1x8x8xf32> to vector<1xf32>
    %63 = vector.shape_cast %62 : vector<1xf32> to vector<1x1x1xf32>
    %64 = vector.extract %63[0, 0, 0] : f32 from vector<1x1x1xf32>
    %65 = arith.addf %52, %64 : f32
    %c0_24 = arith.constant 0 : index
    %c0_25 = arith.constant 0 : index
    %66 = vector.load %arg5[%c0_24, %c0_25] : memref<8x8xf32, #tpu.memory_space<vmem>>, vector<8x8xf32>
    %cst_26 = arith.constant 0.000000e+00 : f32
    %67 = vector.shape_cast %8 : vector<8x1xi1> to vector<8x1xi1>
    %68 = vector.broadcast %67 : vector<8x1xi1> to vector<8x8xi1>
    %69 = vector.broadcast %cst_26 : f32 to vector<8x8xf32>
    %70 = arith.select %68, %66, %69 : vector<8x8xi1>, vector<8x8xf32>
    %71 = arith.subf %70, %24 : vector<8x8xf32>
    %72 = arith.mulf %71, %71 : vector<8x8xf32>
    %73 = arith.mulf %72, %25 : vector<8x8xf32>
    %74 = vector.shape_cast %73 : vector<8x8xf32> to vector<1x8x8xf32>
    %cst_27 = arith.constant dense<0.000000e+00> : vector<1xf32>
    %75 = vector.multi_reduction <add>, %74, %cst_27 [1, 2] : vector<1x8x8xf32> to vector<1xf32>
    %76 = vector.shape_cast %75 : vector<1xf32> to vector<1x1x1xf32>
    %77 = vector.extract %76[0, 0, 0] : f32 from vector<1x1x1xf32>
    %78 = arith.addf %65, %77 : f32
    %79 = vector.shape_cast %26 : vector<8x8xf32> to vector<1x8x8xf32>
    %cst_28 = arith.constant dense<0.000000e+00> : vector<1xf32>
    %80 = vector.multi_reduction <add>, %79, %cst_28 [1, 2] : vector<1x8x8xf32> to vector<1xf32>
    %81 = vector.shape_cast %80 : vector<1xf32> to vector<1x1x1xf32>
    %82 = vector.extract %81[0, 0, 0] : f32 from vector<1x1x1xf32>
    %c0_29 = arith.constant 0 : index
    %83 = memref.load %arg9[%c0_29] : memref<2xf32, #tpu.memory_space<smem>>
    %84 = arith.addf %83, %78 : f32
    %c0_30 = arith.constant 0 : index
    %85 = memref.load %arg9[%c0_30] : memref<2xf32, #tpu.memory_space<smem>>
    memref.store %84, %arg9[%c0_30] : memref<2xf32, #tpu.memory_space<smem>>
    %c1 = arith.constant 1 : index
    %86 = memref.load %arg9[%c1] : memref<2xf32, #tpu.memory_space<smem>>
    %87 = arith.addf %86, %82 : f32
    %c1_31 = arith.constant 1 : index
    %88 = memref.load %arg9[%c1_31] : memref<2xf32, #tpu.memory_space<smem>>
    memref.store %87, %arg9[%c1_31] : memref<2xf32, #tpu.memory_space<smem>>
    %c2_i32 = arith.constant 2 : i32
    %89 = arith.cmpi eq, %arg0, %c2_i32 : i32
    %90 = arith.extui %89 : i1 to i32
    %c0_i32_32 = arith.constant 0 : i32
    %91 = arith.cmpi ne, %90, %c0_i32_32 : i32
    scf.if %91 {
      %c0_33 = arith.constant 0 : index
      %92 = memref.load %arg9[%c0_33] : memref<2xf32, #tpu.memory_space<smem>>
      %cst_34 = arith.constant 1.250000e-02 : f32
      %93 = arith.mulf %92, %cst_34 : f32
      %c1_35 = arith.constant 1 : index
      %94 = memref.load %arg9[%c1_35] : memref<2xf32, #tpu.memory_space<smem>>
      %cst_36 = arith.constant 5.000000e-02 : f32
      %95 = arith.mulf %94, %cst_36 : f32
      %96 = arith.addf %93, %95 : f32
      %cst_37 = arith.constant 5.000000e-01 : f32
      %97 = arith.mulf %cst_37, %96 : f32
      %c0_38 = arith.constant 0 : index
      %c0_39 = arith.constant 0 : index
      %98 = memref.load %arg8[%c0_38, %c0_39] : memref<1x1xf32, #tpu.memory_space<smem>>
      memref.store %97, %arg8[%c0_38, %c0_39] : memref<1x1xf32, #tpu.memory_space<smem>>
    } else {
    }
    return
  }
  func.func @transform_0(%arg0: i32) -> (i32, i32) {
    %c0_i32 = arith.constant 0 : i32
    %c0_i32_0 = arith.constant 0 : i32
    return %arg0, %c0_i32 : i32, i32
  }
  func.func @transform_1(%arg0: i32) -> (i32, i32) {
    %c0_i32 = arith.constant 0 : i32
    %c0_i32_0 = arith.constant 0 : i32
    return %arg0, %c0_i32 : i32, i32
  }
  func.func @transform_2(%arg0: i32) -> (i32, i32) {
    %c0_i32 = arith.constant 0 : i32
    %c0_i32_0 = arith.constant 0 : i32
    return %arg0, %c0_i32 : i32, i32
  }
  func.func @transform_3(%arg0: i32) -> (i32, i32) {
    %c0_i32 = arith.constant 0 : i32
    %c0_i32_0 = arith.constant 0 : i32
    return %arg0, %c0_i32 : i32, i32
  }
  func.func @transform_4(%arg0: i32) -> (i32, i32) {
    %c0_i32 = arith.constant 0 : i32
    %c0_i32_0 = arith.constant 0 : i32
    return %arg0, %c0_i32 : i32, i32
  }
  func.func @transform_5(%arg0: i32) -> (i32, i32) {
    %c0_i32 = arith.constant 0 : i32
    %c0_i32_0 = arith.constant 0 : i32
    %c0_i32_1 = arith.constant 0 : i32
    return %c0_i32, %c0_i32_0 : i32, i32
  }
  func.func @transform_6(%arg0: i32) -> (i32, i32) {
    %c0_i32 = arith.constant 0 : i32
    %c0_i32_0 = arith.constant 0 : i32
    %c0_i32_1 = arith.constant 0 : i32
    return %c0_i32, %c0_i32_0 : i32, i32
  }
  func.func @transform_7(%arg0: i32) -> (i32, i32) {
    %c0_i32 = arith.constant 0 : i32
    %c0_i32_0 = arith.constant 0 : i32
    %c0_i32_1 = arith.constant 0 : i32
    return %c0_i32, %c0_i32_0 : i32, i32
  }
}

</mosaic_0001>

<llo_original>
// kernel: tpu_custom_call.1
$region0: #{tpu_custom_call.1}
  #allocation0 [shape = 'u32[]', space=smem, size = 0x4, offset = 0x4, fixed_abs, tag = 'smem constant byte address 0x4 - core index']
  #allocation1 [shape = 'u32[72,128]{1,0:T(1,128)}', space=vmem, size = 0x9000, scoped, tag = 'internal scratch']
  #allocation2 [shape = 'f32[2]{0:T(128)}', space=smem, size = 0x200, scoped, tag = 'scratch operand']
  %s0 = inlined_call_operand.vmem [shape: s32[20,1], index: 0, kind: input, shape index: {}]
  %s1 = inlined_call_operand.vmem [shape: f32[20,8], index: 1, kind: input, shape index: {}]
  %s2 = inlined_call_operand.vmem [shape: f32[20,8], index: 2, kind: input, shape index: {}]
  %s3 = inlined_call_operand.vmem [shape: f32[20,8], index: 3, kind: input, shape index: {}]
  %s4 = inlined_call_operand.vmem [shape: f32[20,8], index: 4, kind: input, shape index: {}]
  %s5 = inlined_call_operand.vmem [shape: f32[8,8], index: 5, kind: input, shape index: {}]
  %s6 = inlined_call_operand.vmem [shape: f32[8,8], index: 6, kind: input, shape index: {}]
  %s7 = inlined_call_operand.hbm [shape: f32[1,1], index: 7, kind: output, shape index: {}]
  %s8 = sld [smem:[#allocation0]]
  $region69: #{tpu_custom_call.1} parent=0
    _
  %s10 = ssub.s32 1, %s8
  %s11 = scalar_select 0, %s10, %s8
  $region1: #{tpu_custom_call.1} parent=0
    #allocation3 [shape = 'u8[512]{0}', space=smem, size = 0x200, scoped, tag = 'output window, operand 0, single buffered']
    #allocation4 [shape = 's32[2]{0}', space=sflag, size = 0x8, scoped, tag = 'scoped memory for tpu_custom_call.1']
    %12 = vsyncpa [#allocation4], 0
    loop: start=0, step=1, limit=5
    $region2: #{tpu_custom_call.1} parent=1 // loop_pre_header
      _
    $region3: #{tpu_custom_call.1} parent=1 // loop_header
      %s14 = sphi 0, %s18
      %p15 = scmp.ge.s32.totalorder %s14, 5
      %s24 = sphi 0, %s26
      %s27 = sphi 0, %s24
      %s28 = sphi 0, %s27
      %s44 = sphi 0, %s28
      %s50 = sphi 0, %s52
      %s53 = sphi 0, %s50
      %s54 = sphi 0, %s53
      %s70 = sphi 0, %s54
      %s76 = sphi 0, %s78
      %s79 = sphi 0, %s76
      %s80 = sphi 0, %s79
      %s96 = sphi 0, %s80
      %s102 = sphi 0, %s104
      %s105 = sphi 0, %s102
      %s106 = sphi 0, %s105
      %s122 = sphi 0, %s106
      %s128 = sphi 0, %s130
      %s131 = sphi 0, %s128
      %s132 = sphi 0, %s131
      %s148 = sphi 0, %s132
      %s152 = sphi 0, %s152
      %s154 = sphi 0, %s152
      %s155 = sphi 0, %s154
      %s169 = sphi 0, %s155
      %s173 = sphi 0, %s173
      %s175 = sphi 0, %s173
      %s176 = sphi 0, %s175
      %s190 = sphi 0, %s176
      %s194 = sphi 0, %s194
      %s196 = sphi 0, %s194
      %s197 = sphi 0, %s196
      %s211 = sphi 0, %s197
    $region4: #{tpu_custom_call.1} parent=1 // loop_header_branch
      %17 = sbr.rel (%p15) target = $region8
    $region5: #{tpu_custom_call.1} parent=1 // loop_body
      %s19 = ssub.s32 %s14, 1
      %s20 = ssub.s32 %s14, 2
      %s21 = sadd.s32 %s14, 1
      %s22 = ssub.s32 %s14, %s21
      %p23 = scmp.eq.s32.totalorder %s22, 0
      %s25 = sadd.s32 %s24, 1
      %s26 = scalar_select %p23, %s24, %s25
      %p29 = pneg %p23
      %p30 = scmp.eq.s32.totalorder %s14, 2
      %p31 = por %p29, %p30
      %p32 = scmp.ne.s32.totalorder %s24, %s27
      %p33 = scmp.eq.s32.totalorder %s14, 0
      %p34 = por %p32, %p33
      %p35 = scmp.ne.s32.totalorder %s24, %s27
      %p36 = scmp.eq.s32.totalorder %s19, 2
      %p37 = por %p35, %p36
      %p38 = scmp.ne.s32.totalorder %s27, %s28
      %p39 = scmp.eq.s32.totalorder %s19, 0
      %p40 = por %p38, %p39
      %p41 = scmp.ne.s32.totalorder %s27, %s28
      %p42 = scmp.eq.s32.totalorder %s20, 2
      %p43 = por %p41, %p42
      %p45 = scmp.ne.s32.totalorder %s28, %s44
      %p46 = scmp.eq.s32.totalorder %s20, 0
      %p47 = por %p45, %p46
      %s48 = ssub.s32 %s14, %s21
      %p49 = scmp.eq.s32.totalorder %s48, 0
      %s51 = sadd.s32 %s50, 1
      %s52 = scalar_select %p49, %s50, %s51
      %p55 = pneg %p49
      %p56 = scmp.eq.s32.totalorder %s14, 2
      %p57 = por %p55, %p56
      %p58 = scmp.ne.s32.totalorder %s50, %s53
      %p59 = scmp.eq.s32.totalorder %s14, 0
      %p60 = por %p58, %p59
      %p61 = scmp.ne.s32.totalorder %s50, %s53
      %p62 = scmp.eq.s32.totalorder %s19, 2
      %p63 = por %p61, %p62
      %p64 = scmp.ne.s32.totalorder %s53, %s54
      %p65 = scmp.eq.s32.totalorder %s19, 0
      %p66 = por %p64, %p65
      %p67 = scmp.ne.s32.totalorder %s53, %s54
      %p68 = scmp.eq.s32.totalorder %s20, 2
      %p69 = por %p67, %p68
      %p71 = scmp.ne.s32.totalorder %s54, %s70
      %p72 = scmp.eq.s32.totalorder %s20, 0
      %p73 = por %p71, %p72
      %s74 = ssub.s32 %s14, %s21
      %p75 = scmp.eq.s32.totalorder %s74, 0
      %s77 = sadd.s32 %s76, 1
      %s78 = scalar_select %p75, %s76, %s77
      %p81 = pneg %p75
      %p82 = scmp.eq.s32.totalorder %s14, 2
      %p83 = por %p81, %p82
      %p84 = scmp.ne.s32.totalorder %s76, %s79
      %p85 = scmp.eq.s32.totalorder %s14, 0
      %p86 = por %p84, %p85
      %p87 = scmp.ne.s32.totalorder %s76, %s79
      %p88 = scmp.eq.s32.totalorder %s19, 2
      %p89 = por %p87, %p88
      %p90 = scmp.ne.s32.totalorder %s79, %s80
      %p91 = scmp.eq.s32.totalorder %s19, 0
      %p92 = por %p90, %p91
      %p93 = scmp.ne.s32.totalorder %s79, %s80
      %p94 = scmp.eq.s32.totalorder %s20, 2
      %p95 = por %p93, %p94
      %p97 = scmp.ne.s32.totalorder %s80, %s96
      %p98 = scmp.eq.s32.totalorder %s20, 0
      %p99 = por %p97, %p98
      %s100 = ssub.s32 %s14, %s21
      %p101 = scmp.eq.s32.totalorder %s100, 0
      %s103 = sadd.s32 %s102, 1
      %s104 = scalar_select %p101, %s102, %s103
      %p107 = pneg %p101
      %p108 = scmp.eq.s32.totalorder %s14, 2
      %p109 = por %p107, %p108
      %p110 = scmp.ne.s32.totalorder %s102, %s105
      %p111 = scmp.eq.s32.totalorder %s14, 0
      %p112 = por %p110, %p111
      %p113 = scmp.ne.s32.totalorder %s102, %s105
      %p114 = scmp.eq.s32.totalorder %s19, 2
      %p115 = por %p113, %p114
      %p116 = scmp.ne.s32.totalorder %s105, %s106
      %p117 = scmp.eq.s32.totalorder %s19, 0
      %p118 = por %p116, %p117
      %p119 = scmp.ne.s32.totalorder %s105, %s106
      %p120 = scmp.eq.s32.totalorder %s20, 2
      %p121 = por %p119, %p120
      %p123 = scmp.ne.s32.totalorder %s106, %s122
      %p124 = scmp.eq.s32.totalorder %s20, 0
      %p125 = por %p123, %p124
      %s126 = ssub.s32 %s14, %s21
      %p127 = scmp.eq.s32.totalorder %s126, 0
      %s129 = sadd.s32 %s128, 1
      %s130 = scalar_select %p127, %s128, %s129
      %p133 = pneg %p127
      %p134 = scmp.eq.s32.totalorder %s14, 2
      %p135 = por %p133, %p134
      %p136 = scmp.ne.s32.totalorder %s128, %s131
      %p137 = scmp.eq.s32.totalorder %s14, 0
      %p138 = por %p136, %p137
      %p139 = scmp.ne.s32.totalorder %s128, %s131
      %p140 = scmp.eq.s32.totalorder %s19, 2
      %p141 = por %p139, %p140
      %p142 = scmp.ne.s32.totalorder %s131, %s132
      %p143 = scmp.eq.s32.totalorder %s19, 0
      %p144 = por %p142, %p143
      %p145 = scmp.ne.s32.totalorder %s131, %s132
      %p146 = scmp.eq.s32.totalorder %s20, 2
      %p147 = por %p145, %p146
      %p149 = scmp.ne.s32.totalorder %s132, %s148
      %p150 = scmp.eq.s32.totalorder %s20, 0
      %p151 = por %p149, %p150
      %s153 = sadd.s32 %s152, 1
      %p156 = scmp.eq.s32.totalorder %s14, 2
      %p157 = scmp.ne.s32.totalorder %s152, %s154
      %p158 = scmp.eq.s32.totalorder %s14, 0
      %p159 = por %p157, %p158
      %p160 = scmp.ne.s32.totalorder %s152, %s154
      %p161 = scmp.eq.s32.totalorder %s19, 2
      %p162 = por %p160, %p161
      %p163 = scmp.ne.s32.totalorder %s154, %s155
      %p164 = scmp.eq.s32.totalorder %s19, 0
      %p165 = por %p163, %p164
      %p166 = scmp.ne.s32.totalorder %s154, %s155
      %p167 = scmp.eq.s32.totalorder %s20, 2
      %p168 = por %p166, %p167
      %p170 = scmp.ne.s32.totalorder %s155, %s169
      %p171 = scmp.eq.s32.totalorder %s20, 0
      %p172 = por %p170, %p171
      %s174 = sadd.s32 %s173, 1
      %p177 = scmp.eq.s32.totalorder %s14, 2
      %p178 = scmp.ne.s32.totalorder %s173, %s175
      %p179 = scmp.eq.s32.totalorder %s14, 0
      %p180 = por %p178, %p179
      %p181 = scmp.ne.s32.totalorder %s173, %s175
      %p182 = scmp.eq.s32.totalorder %s19, 2
      %p183 = por %p181, %p182
      %p184 = scmp.ne.s32.totalorder %s175, %s176
      %p185 = scmp.eq.s32.totalorder %s19, 0
      %p186 = por %p184, %p185
      %p187 = scmp.ne.s32.totalorder %s175, %s176
      %p188 = scmp.eq.s32.totalorder %s20, 2
      %p189 = por %p187, %p188
      %p191 = scmp.ne.s32.totalorder %s176, %s190
      %p192 = scmp.eq.s32.totalorder %s20, 0
      %p193 = por %p191, %p192
      %s195 = sadd.s32 %s194, 1
      %p198 = scmp.eq.s32.totalorder %s14, 2
      %p199 = scmp.ne.s32.totalorder %s194, %s196
      %p200 = scmp.eq.s32.totalorder %s14, 0
      %p201 = por %p199, %p200
      %p202 = scmp.ne.s32.totalorder %s194, %s196
      %p203 = scmp.eq.s32.totalorder %s19, 2
      %p204 = por %p202, %p203
      %p205 = scmp.ne.s32.totalorder %s196, %s197
      %p206 = scmp.eq.s32.totalorder %s19, 0
      %p207 = por %p205, %p206
      %p208 = scmp.ne.s32.totalorder %s196, %s197
      %p209 = scmp.eq.s32.totalorder %s20, 2
      %p210 = por %p208, %p209
      %p212 = scmp.ne.s32.totalorder %s197, %s211
      %p213 = scmp.eq.s32.totalorder %s20, 0
      %p214 = por %p212, %p213
      %p215 = scmp.le.s32.totalorder 1, %s14
      %p216 = scmp.lt.s32.totalorder %s14, 4
      %p217 = pnand %p215, %p216
      %p218 = pneg %p217
      // Predicated region
      $region9: #{tpu_custom_call.1} parent=5 // pred_check
        _
      $region10: #{tpu_custom_call.1} parent=5 // pred_check_branch
        %220 = sbr.rel (%p217) target = $region12
      $region11: #{tpu_custom_call.1} parent=5 // pred_region
        %s221 = ssub.s32 %s14, 1
        // Predicated region
        $region13: #{tpu_custom_call.1} parent=11 // pred_check
          %p222 = pneg %p165
        $region14: #{tpu_custom_call.1} parent=11 // pred_check_branch
          %224 = sbr.rel (%p222) target = $region16
        $region15: #{tpu_custom_call.1} parent=11 // pred_region
          _
        $region16: #{tpu_custom_call.1} parent=11 // pred_fallthru
          _
        // Predicated region
        $region17: #{tpu_custom_call.1} parent=11 // pred_check
          %p225 = pneg %p186
        $region18: #{tpu_custom_call.1} parent=11 // pred_check_branch
          %227 = sbr.rel (%p225) target = $region20
        $region19: #{tpu_custom_call.1} parent=11 // pred_region
          _
        $region20: #{tpu_custom_call.1} parent=11 // pred_fallthru
          _
      $region12: #{tpu_custom_call.1} parent=5 // pred_fallthru
        _
      %p228 = scmp.lt.s32.totalorder %s14, 3
      // Predicated region
      $region21: #{tpu_custom_call.1} parent=5 // pred_check
        %p229 = pneg %p228
      $region22: #{tpu_custom_call.1} parent=5 // pred_check_branch
        %231 = sbr.rel (%p229) target = $region24
      $region23: #{tpu_custom_call.1} parent=5 // pred_region
        // Predicated region
        $region25: #{tpu_custom_call.1} parent=23 // pred_check
          %p232 = pneg %p34
        $region26: #{tpu_custom_call.1} parent=23 // pred_check_branch
          %234 = sbr.rel (%p232) target = $region28
        $region27: #{tpu_custom_call.1} parent=23 // pred_region
          %p235 = scmp.lt.s32.totalorder %s14, 2
          %s236 = scalar_select %p235, %s14, 2
          %s237 = smul.addr %s236, 8
          %s238 = scalar_lea.vmem %s0, %s237
        $region28: #{tpu_custom_call.1} parent=23 // pred_fallthru
          _
        // Predicated region
        $region29: #{tpu_custom_call.1} parent=23 // pred_check
          %p239 = pneg %p60
        $region30: #{tpu_custom_call.1} parent=23 // pred_check_branch
          %241 = sbr.rel (%p239) target = $region32
        $region31: #{tpu_custom_call.1} parent=23 // pred_region
          %p242 = scmp.lt.s32.totalorder %s14, 2
          %s243 = scalar_select %p242, %s14, 2
          %s244 = smul.addr %s243, 8
          %s245 = scalar_lea.vmem %s1, %s244
        $region32: #{tpu_custom_call.1} parent=23 // pred_fallthru
          _
        // Predicated region
        $region33: #{tpu_custom_call.1} parent=23 // pred_check
          %p246 = pneg %p86
        $region34: #{tpu_custom_call.1} parent=23 // pred_check_branch
          %248 = sbr.rel (%p246) target = $region36
        $region35: #{tpu_custom_call.1} parent=23 // pred_region
          %p249 = scmp.lt.s32.totalorder %s14, 2
          %s250 = scalar_select %p249, %s14, 2
          %s251 = smul.addr %s250, 8
          %s252 = scalar_lea.vmem %s2, %s251
        $region36: #{tpu_custom_call.1} parent=23 // pred_fallthru
          _
        // Predicated region
        $region37: #{tpu_custom_call.1} parent=23 // pred_check
          %p253 = pneg %p112
        $region38: #{tpu_custom_call.1} parent=23 // pred_check_branch
          %255 = sbr.rel (%p253) target = $region40
        $region39: #{tpu_custom_call.1} parent=23 // pred_region
          %p256 = scmp.lt.s32.totalorder %s14, 2
          %s257 = scalar_select %p256, %s14, 2
          %s258 = smul.addr %s257, 8
          %s259 = scalar_lea.vmem %s3, %s258
        $region40: #{tpu_custom_call.1} parent=23 // pred_fallthru
          _
        // Predicated region
        $region41: #{tpu_custom_call.1} parent=23 // pred_check
          %p260 = pneg %p138
        $region42: #{tpu_custom_call.1} parent=23 // pred_check_branch
          %262 = sbr.rel (%p260) target = $region44
        $region43: #{tpu_custom_call.1} parent=23 // pred_region
          %p263 = scmp.lt.s32.totalorder %s14, 2
          %s264 = scalar_select %p263, %s14, 2
          %s265 = smul.addr %s264, 8
          %s266 = scalar_lea.vmem %s4, %s265
        $region44: #{tpu_custom_call.1} parent=23 // pred_fallthru
          _
      $region24: #{tpu_custom_call.1} parent=5 // pred_fallthru
        _
      %p267 = scmp.le.s32.totalorder 1, %s14
      %p268 = scmp.lt.s32.totalorder %s14, 4
      %p269 = pnand %p267, %p268
      %p270 = pneg %p269
      // Predicated region
      $region45: #{tpu_custom_call.1} parent=5 // pred_check
        _
      $region46: #{tpu_custom_call.1} parent=5 // pred_check_branch
        %272 = sbr.rel (%p269) target = $region48
      $region47: #{tpu_custom_call.1} parent=5 // pred_region
        %s273 = ssub.s32 %s14, 1
        %p274 = scmp.lt.s32.totalorder %s19, 2
        %s275 = scalar_select %p274, %s19, 2
        %s276 = smul.addr %s275, 8
        %s277 = scalar_lea.vmem %s0, %s276
        %p278 = pneg %p40
        %p279 = pneg %p37
        %p280 = scmp.lt.s32.totalorder %s19, 2
        %s281 = scalar_select %p280, %s19, 2
        %s282 = smul.addr %s281, 8
        %s283 = scalar_lea.vmem %s1, %s282
        %p284 = pneg %p66
        %p285 = pneg %p63
        %p286 = scmp.lt.s32.totalorder %s19, 2
        %s287 = scalar_select %p286, %s19, 2
        %s288 = smul.addr %s287, 8
        %s289 = scalar_lea.vmem %s2, %s288
        %p290 = pneg %p92
        %p291 = pneg %p89
        %p292 = scmp.lt.s32.totalorder %s19, 2
        %s293 = scalar_select %p292, %s19, 2
        %s294 = smul.addr %s293, 8
        %s295 = scalar_lea.vmem %s3, %s294
        %p296 = pneg %p118
        %p297 = pneg %p115
        %p298 = scmp.lt.s32.totalorder %s19, 2
        %s299 = scalar_select %p298, %s19, 2
        %s300 = smul.addr %s299, 8
        %s301 = scalar_lea.vmem %s4, %s300
        %p302 = pneg %p144
        %p303 = pneg %p141
        %p304 = pneg %p165
        %p305 = pneg %p162
        %p306 = pneg %p186
        %p307 = pneg %p183
        %p308 = pneg %p207
        %p309 = pneg %p204
        %p310 = scmp.lt.s32.totalorder %s19, 2
        %s311 = scalar_select %p310, %s19, 2
        %s312 = smul.addr %s311, 8
        %s313 = scalar_lea.vmem %s0, %s312
        %p314 = scmp.lt.s32.totalorder %s19, 2
        %s315 = scalar_select %p314, %s19, 2
        %s316 = smul.addr %s315, 8
        %s317 = scalar_lea.vmem %s1, %s316
        %p318 = scmp.lt.s32.totalorder %s19, 2
        %s319 = scalar_select %p318, %s19, 2
        %s320 = smul.addr %s319, 8
        %s321 = scalar_lea.vmem %s2, %s320
        %p322 = scmp.lt.s32.totalorder %s19, 2
        %s323 = scalar_select %p322, %s19, 2
        %s324 = smul.addr %s323, 8
        %s325 = scalar_lea.vmem %s3, %s324
        %p326 = scmp.lt.s32.totalorder %s19, 2
        %s327 = scalar_select %p326, %s19, 2
        %s328 = smul.addr %s327, 8
        %s329 = scalar_lea.vmem %s4, %s328
        %p330 = scmp.eq.s32.totalorder %s19, 0
        // Predicated region
        $region49: #{tpu_custom_call.1} parent=47 // pred_check
          %p331 = pneg %p330
        $region50: #{tpu_custom_call.1} parent=47 // pred_check_branch
          %333 = sbr.rel (%p331) target = $region52
        $region51: #{tpu_custom_call.1} parent=47 // pred_region
          %s334 = scalar_lea.smem [#allocation2], 0
          %335 = sst [smem:[%s334]] 0.0
          %s336 = scalar_lea.smem [#allocation2], 1
          %337 = sst [smem:[%s336]] 0.0
        $region52: #{tpu_custom_call.1} parent=47 // pred_fallthru
          _
        %v338 = vlaneseq
        %v339 = vshrl.u32 %v338, 7
        %s340 = smul.u32 %s19, 8
        %v341 = vstv %s340
        %v342 = vadd.s32 %v339, %v341
        %vm343 = vcmp.lt.s32.totalorder %v342, 20
        %v344 = vld [vmem:[%s313] sm:$0xff]
        %v345 = vlaneseq
        %v346 = vand.u32 %v345, 127
        %347 = vset.pattern.permute.xlu0 0
        %348 = vperm.xlu0 %347, %v344
        %v349 = vpop.permute.xlu0 %348
        %vm350 = vcmp.eq.s32.totalorder %v349, %v346
        %v351 = vsel %vm343, 1, 0
        %vm352 = vcmp.eq.s32.totalorder %v351, 1
        %vm353 = vmand %vm352, %vm350
        %v354 = vsel %vm353, 1.0, 0.0
        %v355 = vld [vmem:[%s5] sm:$0xff]
        %v356 = vld [vmem:[%s6] sm:$0xff]
        %v357 = vmul.f32 %v356, %v356
        %v358 = vrcp.pop %v357
        %v359 = vmul.f32 %v357, %v358
        %v360 = vsub.f32 1.0, %v359
        %v361 = vmul.f32 %v358, %v360
        %v362 = vadd.f32 %v358, %v361
        %vm363 = vweird.f32 %v357
        %vm364 = vweird.f32 %v358
        %vm365 = vmor %vm363, %vm364
        %v366 = vsel %vm365, %v358, %v362
        %v367 = vand.u32 2147483647, %v357
        %vm368 = vcmp.eq.f32.partialorder %v367, 8.507059e+37
        %v369 = vand.u32 %v357, 2147483648
        %v370 = vor.u32 1.1754944e-38, %v369
        %v371 = vsel %vm368, %v370, %v366
        %v372 = vmul.f32 1.0, %v371
        %v373 = vlog2.pop %v357
        %v374 = vmul.f32 %v373, 0.6931472
        %vm375 = vcmask 64512
        %v377 = vsel %vm375, %v354, 0
        %379 = vmatpush.msra.mxu0 0.0
        %380 = vmatpush.msra.mxu0 0.0
        %381 = vmatpush.msra.mxu0 0.0
        %382 = vmatpush.msra.mxu0 0.0
        %383 = vmatpush.msra.mxu0 0.0
        %384 = vmatpush.msra.mxu0 0.0
        %385 = vmatpush.msra.mxu0 0.0
        %386 = vmatpush.msra.mxu0 0.0
        %387 = vmatpush.msra.mxu0 0.0
        %388 = vmatpush.msra.mxu0 0.0
        %389 = vmatpush.msra.mxu0 0.0
        %390 = vmatpush.msra.mxu0 0.0
        %391 = vmatpush.msra.mxu0 0.0
        %392 = vmatpush.msra.mxu0 0.0
        %393 = vmatpush.msra.mxu0 0.0
        %v394 = vand.u32 %v355, 4294901760
        %395 = vmatpush.msra.mxu0 %v394
        %v396 = vand.u32 %v377, 4294901760
        %v397 = vsub.f32 %v377, %v396
        %v398 = vand.u32 %v397, 4294901760
        %v399 = vsub.f32 %v397, %v398
        %v400 = vand.u32 %v399, 4294901760
        %401 = vmatmul.f32.gmra.mxu0 %v400
        %v402 = vpop.f32.mrf.mxu0
        %v403 = vadd.f32 0.0, %v402
        %404 = vdwg.mxu0
        %405 = vmatpush.msra.mxu0 0.0
        %406 = vmatpush.msra.mxu0 0.0
        %407 = vmatpush.msra.mxu0 0.0
        %408 = vmatpush.msra.mxu0 0.0
        %409 = vmatpush.msra.mxu0 0.0
        %410 = vmatpush.msra.mxu0 0.0
        %411 = vmatpush.msra.mxu0 0.0
        %412 = vmatpush.msra.mxu0 0.0
        %413 = vmatpush.msra.mxu0 0.0
        %414 = vmatpush.msra.mxu0 0.0
        %415 = vmatpush.msra.mxu0 0.0
        %416 = vmatpush.msra.mxu0 0.0
        %417 = vmatpush.msra.mxu0 0.0
        %418 = vmatpush.msra.mxu0 0.0
        %419 = vmatpush.msra.mxu0 0.0
        %v420 = vand.u32 %v355, 4294901760
        %v421 = vsub.f32 %v355, %v420
        %v422 = vand.u32 %v421, 4294901760
        %v423 = vsub.f32 %v421, %v422
        %v424 = vand.u32 %v423, 4294901760
        %425 = vmatpush.msra.mxu0 %v424
        %v426 = vand.u32 %v377, 4294901760
        %427 = vmatmul.f32.gmra.mxu0 %v426
        %v428 = vpop.f32.mrf.mxu0
        %v429 = vadd.f32 %v403, %v428
        %430 = vdwg.mxu0
        %431 = vmatpush.msra.mxu0 0.0
        %432 = vmatpush.msra.mxu0 0.0
        %433 = vmatpush.msra.mxu0 0.0
        %434 = vmatpush.msra.mxu0 0.0
        %435 = vmatpush.msra.mxu0 0.0
        %436 = vmatpush.msra.mxu0 0.0
        %437 = vmatpush.msra.mxu0 0.0
        %438 = vmatpush.msra.mxu0 0.0
        %439 = vmatpush.msra.mxu0 0.0
        %440 = vmatpush.msra.mxu0 0.0
        %441 = vmatpush.msra.mxu0 0.0
        %442 = vmatpush.msra.mxu0 0.0
        %443 = vmatpush.msra.mxu0 0.0
        %444 = vmatpush.msra.mxu0 0.0
        %445 = vmatpush.msra.mxu0 0.0
        %v446 = vand.u32 %v355, 4294901760
        %v447 = vsub.f32 %v355, %v446
        %448 = vmatpush.msra.mxu0 %v447
        %v449 = vand.u32 %v377, 4294901760
        %v450 = vsub.f32 %v377, %v449
        %451 = vmatmul.f32.gmra.mxu0 %v450
        %v452 = vpop.f32.mrf.mxu0
        %v453 = vadd.f32 %v429, %v452
        %454 = vdwg.mxu0
        %455 = vmatpush.msra.mxu0 0.0
        %456 = vmatpush.msra.mxu0 0.0
        %457 = vmatpush.msra.mxu0 0.0
        %458 = vmatpush.msra.mxu0 0.0
        %459 = vmatpush.msra.mxu0 0.0
        %460 = vmatpush.msra.mxu0 0.0
        %461 = vmatpush.msra.mxu0 0.0
        %462 = vmatpush.msra.mxu0 0.0
        %463 = vmatpush.msra.mxu0 0.0
        %464 = vmatpush.msra.mxu0 0.0
        %465 = vmatpush.msra.mxu0 0.0
        %466 = vmatpush.msra.mxu0 0.0
        %467 = vmatpush.msra.mxu0 0.0
        %468 = vmatpush.msra.mxu0 0.0
        %469 = vmatpush.msra.mxu0 0.0
        %v470 = vand.u32 %v355, 4294901760
        %471 = vmatpush.msra.mxu0 %v470
        %v472 = vand.u32 %v377, 4294901760
        %v473 = vsub.f32 %v377, %v472
        %v474 = vand.u32 %v473, 4294901760
        %475 = vmatmul.f32.gmra.mxu0 %v474
        %v476 = vpop.f32.mrf.mxu0
        %v477 = vadd.f32 %v453, %v476
        %478 = vdwg.mxu0
        %479 = vmatpush.msra.mxu0 0.0
        %480 = vmatpush.msra.mxu0 0.0
        %481 = vmatpush.msra.mxu0 0.0
        %482 = vmatpush.msra.mxu0 0.0
        %483 = vmatpush.msra.mxu0 0.0
        %484 = vmatpush.msra.mxu0 0.0
        %485 = vmatpush.msra.mxu0 0.0
        %486 = vmatpush.msra.mxu0 0.0
        %487 = vmatpush.msra.mxu0 0.0
        %488 = vmatpush.msra.mxu0 0.0
        %489 = vmatpush.msra.mxu0 0.0
        %490 = vmatpush.msra.mxu0 0.0
        %491 = vmatpush.msra.mxu0 0.0
        %492 = vmatpush.msra.mxu0 0.0
        %493 = vmatpush.msra.mxu0 0.0
        %v494 = vand.u32 %v355, 4294901760
        %v495 = vsub.f32 %v355, %v494
        %v496 = vand.u32 %v495, 4294901760
        %497 = vmatpush.msra.mxu0 %v496
        %v498 = vand.u32 %v377, 4294901760
        %499 = vmatmul.f32.gmra.mxu0 %v498
        %v500 = vpop.f32.mrf.mxu0
        %v501 = vadd.f32 %v477, %v500
        %502 = vdwg.mxu0
        %503 = vmatpush.msra.mxu0 0.0
        %504 = vmatpush.msra.mxu0 0.0
        %505 = vmatpush.msra.mxu0 0.0
        %506 = vmatpush.msra.mxu0 0.0
        %507 = vmatpush.msra.mxu0 0.0
        %508 = vmatpush.msra.mxu0 0.0
        %509 = vmatpush.msra.mxu0 0.0
        %510 = vmatpush.msra.mxu0 0.0
        %511 = vmatpush.msra.mxu0 0.0
        %512 = vmatpush.msra.mxu0 0.0
        %513 = vmatpush.msra.mxu0 0.0
        %514 = vmatpush.msra.mxu0 0.0
        %515 = vmatpush.msra.mxu0 0.0
        %516 = vmatpush.msra.mxu0 0.0
        %517 = vmatpush.msra.mxu0 0.0
        %v518 = vand.u32 %v355, 4294901760
        %519 = vmatpush.msra.mxu0 %v518
        %v520 = vand.u32 %v377, 4294901760
        %521 = vmatmul.f32.gmra.mxu0 %v520
        %v522 = vpop.f32.mrf.mxu0
        %v523 = vadd.f32 %v501, %v522
        %524 = vdwg.mxu0
        %525 = vmatpush.msra.mxu0 0.0
        %526 = vmatpush.msra.mxu0 0.0
        %527 = vmatpush.msra.mxu0 0.0
        %528 = vmatpush.msra.mxu0 0.0
        %529 = vmatpush.msra.mxu0 0.0
        %530 = vmatpush.msra.mxu0 0.0
        %531 = vmatpush.msra.mxu0 0.0
        %532 = vmatpush.msra.mxu0 0.0
        %533 = vmatpush.msra.mxu0 0.0
        %534 = vmatpush.msra.mxu0 0.0
        %535 = vmatpush.msra.mxu0 0.0
        %536 = vmatpush.msra.mxu0 0.0
        %537 = vmatpush.msra.mxu0 0.0
        %538 = vmatpush.msra.mxu0 0.0
        %539 = vmatpush.msra.mxu0 0.0
        %v540 = vand.u32 %v372, 4294901760
        %541 = vmatpush.msra.mxu0 %v540
        %v542 = vand.u32 %v377, 4294901760
        %v543 = vsub.f32 %v377, %v542
        %v544 = vand.u32 %v543, 4294901760
        %v545 = vsub.f32 %v543, %v544
        %v546 = vand.u32 %v545, 4294901760
        %547 = vmatmul.f32.gmra.mxu0 %v546
        %v548 = vpop.f32.mrf.mxu0
        %v549 = vadd.f32 0.0, %v548
        %550 = vdwg.mxu0
        %551 = vmatpush.msra.mxu0 0.0
        %552 = vmatpush.msra.mxu0 0.0
        %553 = vmatpush.msra.mxu0 0.0
        %554 = vmatpush.msra.mxu0 0.0
        %555 = vmatpush.msra.mxu0 0.0
        %556 = vmatpush.msra.mxu0 0.0
        %557 = vmatpush.msra.mxu0 0.0
        %558 = vmatpush.msra.mxu0 0.0
        %559 = vmatpush.msra.mxu0 0.0
        %560 = vmatpush.msra.mxu0 0.0
        %561 = vmatpush.msra.mxu0 0.0
        %562 = vmatpush.msra.mxu0 0.0
        %563 = vmatpush.msra.mxu0 0.0
        %564 = vmatpush.msra.mxu0 0.0
        %565 = vmatpush.msra.mxu0 0.0
        %v566 = vand.u32 %v372, 4294901760
        %v567 = vsub.f32 %v372, %v566
        %v568 = vand.u32 %v567, 4294901760
        %v569 = vsub.f32 %v567, %v568
        %v570 = vand.u32 %v569, 4294901760
        %571 = vmatpush.msra.mxu0 %v570
        %v572 = vand.u32 %v377, 4294901760
        %573 = vmatmul.f32.gmra.mxu0 %v572
        %v574 = vpop.f32.mrf.mxu0
        %v575 = vadd.f32 %v549, %v574
        %576 = vdwg.mxu0
        %577 = vmatpush.msra.mxu0 0.0
        %578 = vmatpush.msra.mxu0 0.0
        %579 = vmatpush.msra.mxu0 0.0
        %580 = vmatpush.msra.mxu0 0.0
        %581 = vmatpush.msra.mxu0 0.0
        %582 = vmatpush.msra.mxu0 0.0
        %583 = vmatpush.msra.mxu0 0.0
        %584 = vmatpush.msra.mxu0 0.0
        %585 = vmatpush.msra.mxu0 0.0
        %586 = vmatpush.msra.mxu0 0.0
        %587 = vmatpush.msra.mxu0 0.0
        %588 = vmatpush.msra.mxu0 0.0
        %589 = vmatpush.msra.mxu0 0.0
        %590 = vmatpush.msra.mxu0 0.0
        %591 = vmatpush.msra.mxu0 0.0
        %v592 = vand.u32 %v372, 4294901760
        %v593 = vsub.f32 %v372, %v592
        %594 = vmatpush.msra.mxu0 %v593
        %v595 = vand.u32 %v377, 4294901760
        %v596 = vsub.f32 %v377, %v595
        %597 = vmatmul.f32.gmra.mxu0 %v596
        %v598 = vpop.f32.mrf.mxu0
        %v599 = vadd.f32 %v575, %v598
        %600 = vdwg.mxu0
        %601 = vmatpush.msra.mxu0 0.0
        %602 = vmatpush.msra.mxu0 0.0
        %603 = vmatpush.msra.mxu0 0.0
        %604 = vmatpush.msra.mxu0 0.0
        %605 = vmatpush.msra.mxu0 0.0
        %606 = vmatpush.msra.mxu0 0.0
        %607 = vmatpush.msra.mxu0 0.0
        %608 = vmatpush.msra.mxu0 0.0
        %609 = vmatpush.msra.mxu0 0.0
        %610 = vmatpush.msra.mxu0 0.0
        %611 = vmatpush.msra.mxu0 0.0
        %612 = vmatpush.msra.mxu0 0.0
        %613 = vmatpush.msra.mxu0 0.0
        %614 = vmatpush.msra.mxu0 0.0
        %615 = vmatpush.msra.mxu0 0.0
        %v616 = vand.u32 %v372, 4294901760
        %617 = vmatpush.msra.mxu0 %v616
        %v618 = vand.u32 %v377, 4294901760
        %v619 = vsub.f32 %v377, %v618
        %v620 = vand.u32 %v619, 4294901760
        %621 = vmatmul.f32.gmra.mxu0 %v620
        %v622 = vpop.f32.mrf.mxu0
        %v623 = vadd.f32 %v599, %v622
        %624 = vdwg.mxu0
        %625 = vmatpush.msra.mxu0 0.0
        %626 = vmatpush.msra.mxu0 0.0
        %627 = vmatpush.msra.mxu0 0.0
        %628 = vmatpush.msra.mxu0 0.0
        %629 = vmatpush.msra.mxu0 0.0
        %630 = vmatpush.msra.mxu0 0.0
        %631 = vmatpush.msra.mxu0 0.0
        %632 = vmatpush.msra.mxu0 0.0
        %633 = vmatpush.msra.mxu0 0.0
        %634 = vmatpush.msra.mxu0 0.0
        %635 = vmatpush.msra.mxu0 0.0
        %636 = vmatpush.msra.mxu0 0.0
        %637 = vmatpush.msra.mxu0 0.0
        %638 = vmatpush.msra.mxu0 0.0
        %639 = vmatpush.msra.mxu0 0.0
        %v640 = vand.u32 %v372, 4294901760
        %v641 = vsub.f32 %v372, %v640
        %v642 = vand.u32 %v641, 4294901760
        %643 = vmatpush.msra.mxu0 %v642
        %v644 = vand.u32 %v377, 4294901760
        %645 = vmatmul.f32.gmra.mxu0 %v644
        %v646 = vpop.f32.mrf.mxu0
        %v647 = vadd.f32 %v623, %v646
        %648 = vdwg.mxu0
        %649 = vmatpush.msra.mxu0 0.0
        %650 = vmatpush.msra.mxu0 0.0
        %651 = vmatpush.msra.mxu0 0.0
        %652 = vmatpush.msra.mxu0 0.0
        %653 = vmatpush.msra.mxu0 0.0
        %654 = vmatpush.msra.mxu0 0.0
        %655 = vmatpush.msra.mxu0 0.0
        %656 = vmatpush.msra.mxu0 0.0
        %657 = vmatpush.msra.mxu0 0.0
        %658 = vmatpush.msra.mxu0 0.0
        %659 = vmatpush.msra.mxu0 0.0
        %660 = vmatpush.msra.mxu0 0.0
        %661 = vmatpush.msra.mxu0 0.0
        %662 = vmatpush.msra.mxu0 0.0
        %663 = vmatpush.msra.mxu0 0.0
        %v664 = vand.u32 %v372, 4294901760
        %665 = vmatpush.msra.mxu0 %v664
        %v666 = vand.u32 %v377, 4294901760
        %667 = vmatmul.f32.gmra.mxu0 %v666
        %v668 = vpop.f32.mrf.mxu0
        %v669 = vadd.f32 %v647, %v668
        %670 = vdwg.mxu0
        %671 = vmatpush.msra.mxu0 0.0
        %672 = vmatpush.msra.mxu0 0.0
        %673 = vmatpush.msra.mxu0 0.0
        %674 = vmatpush.msra.mxu0 0.0
        %675 = vmatpush.msra.mxu0 0.0
        %676 = vmatpush.msra.mxu0 0.0
        %677 = vmatpush.msra.mxu0 0.0
        %678 = vmatpush.msra.mxu0 0.0
        %679 = vmatpush.msra.mxu0 0.0
        %680 = vmatpush.msra.mxu0 0.0
        %681 = vmatpush.msra.mxu0 0.0
        %682 = vmatpush.msra.mxu0 0.0
        %683 = vmatpush.msra.mxu0 0.0
        %684 = vmatpush.msra.mxu0 0.0
        %685 = vmatpush.msra.mxu0 0.0
        %v686 = vand.u32 %v374, 4294901760
        %687 = vmatpush.msra.mxu0 %v686
        %v688 = vand.u32 %v377, 4294901760
        %v689 = vsub.f32 %v377, %v688
        %v690 = vand.u32 %v689, 4294901760
        %v691 = vsub.f32 %v689, %v690
        %v692 = vand.u32 %v691, 4294901760
        %693 = vmatmul.f32.gmra.mxu0 %v692
        %v694 = vpop.f32.mrf.mxu0
        %v695 = vadd.f32 0.0, %v694
        %696 = vdwg.mxu0
        %697 = vmatpush.msra.mxu0 0.0
        %698 = vmatpush.msra.mxu0 0.0
        %699 = vmatpush.msra.mxu0 0.0
        %700 = vmatpush.msra.mxu0 0.0
        %701 = vmatpush.msra.mxu0 0.0
        %702 = vmatpush.msra.mxu0 0.0
        %703 = vmatpush.msra.mxu0 0.0
        %704 = vmatpush.msra.mxu0 0.0
        %705 = vmatpush.msra.mxu0 0.0
        %706 = vmatpush.msra.mxu0 0.0
        %707 = vmatpush.msra.mxu0 0.0
        %708 = vmatpush.msra.mxu0 0.0
        %709 = vmatpush.msra.mxu0 0.0
        %710 = vmatpush.msra.mxu0 0.0
        %711 = vmatpush.msra.mxu0 0.0
        %v712 = vand.u32 %v374, 4294901760
        %v713 = vsub.f32 %v374, %v712
        %v714 = vand.u32 %v713, 4294901760
        %v715 = vsub.f32 %v713, %v714
        %v716 = vand.u32 %v715, 4294901760
        %717 = vmatpush.msra.mxu0 %v716
        %v718 = vand.u32 %v377, 4294901760
        %719 = vmatmul.f32.gmra.mxu0 %v718
        %v720 = vpop.f32.mrf.mxu0
        %v721 = vadd.f32 %v695, %v720
        %722 = vdwg.mxu0
        %723 = vmatpush.msra.mxu0 0.0
        %724 = vmatpush.msra.mxu0 0.0
        %725 = vmatpush.msra.mxu0 0.0
        %726 = vmatpush.msra.mxu0 0.0
        %727 = vmatpush.msra.mxu0 0.0
        %728 = vmatpush.msra.mxu0 0.0
        %729 = vmatpush.msra.mxu0 0.0
        %730 = vmatpush.msra.mxu0 0.0
        %731 = vmatpush.msra.mxu0 0.0
        %732 = vmatpush.msra.mxu0 0.0
        %733 = vmatpush.msra.mxu0 0.0
        %734 = vmatpush.msra.mxu0 0.0
        %735 = vmatpush.msra.mxu0 0.0
        %736 = vmatpush.msra.mxu0 0.0
        %737 = vmatpush.msra.mxu0 0.0
        %v738 = vand.u32 %v374, 4294901760
        %v739 = vsub.f32 %v374, %v738
        %740 = vmatpush.msra.mxu0 %v739
        %v741 = vand.u32 %v377, 4294901760
        %v742 = vsub.f32 %v377, %v741
        %743 = vmatmul.f32.gmra.mxu0 %v742
        %v744 = vpop.f32.mrf.mxu0
        %v745 = vadd.f32 %v721, %v744
        %746 = vdwg.mxu0
        %747 = vmatpush.msra.mxu0 0.0
        %748 = vmatpush.msra.mxu0 0.0
        %749 = vmatpush.msra.mxu0 0.0
        %750 = vmatpush.msra.mxu0 0.0
        %751 = vmatpush.msra.mxu0 0.0
        %752 = vmatpush.msra.mxu0 0.0
        %753 = vmatpush.msra.mxu0 0.0
        %754 = vmatpush.msra.mxu0 0.0
        %755 = vmatpush.msra.mxu0 0.0
        %756 = vmatpush.msra.mxu0 0.0
        %757 = vmatpush.msra.mxu0 0.0
        %758 = vmatpush.msra.mxu0 0.0
        %759 = vmatpush.msra.mxu0 0.0
        %760 = vmatpush.msra.mxu0 0.0
        %761 = vmatpush.msra.mxu0 0.0
        %v762 = vand.u32 %v374, 4294901760
        %763 = vmatpush.msra.mxu0 %v762
        %v764 = vand.u32 %v377, 4294901760
        %v765 = vsub.f32 %v377, %v764
        %v766 = vand.u32 %v765, 4294901760
        %767 = vmatmul.f32.gmra.mxu0 %v766
        %v768 = vpop.f32.mrf.mxu0
        %v769 = vadd.f32 %v745, %v768
        %770 = vdwg.mxu0
        %771 = vmatpush.msra.mxu0 0.0
        %772 = vmatpush.msra.mxu0 0.0
        %773 = vmatpush.msra.mxu0 0.0
        %774 = vmatpush.msra.mxu0 0.0
        %775 = vmatpush.msra.mxu0 0.0
        %776 = vmatpush.msra.mxu0 0.0
        %777 = vmatpush.msra.mxu0 0.0
        %778 = vmatpush.msra.mxu0 0.0
        %779 = vmatpush.msra.mxu0 0.0
        %780 = vmatpush.msra.mxu0 0.0
        %781 = vmatpush.msra.mxu0 0.0
        %782 = vmatpush.msra.mxu0 0.0
        %783 = vmatpush.msra.mxu0 0.0
        %784 = vmatpush.msra.mxu0 0.0
        %785 = vmatpush.msra.mxu0 0.0
        %v786 = vand.u32 %v374, 4294901760
        %v787 = vsub.f32 %v374, %v786
        %v788 = vand.u32 %v787, 4294901760
        %789 = vmatpush.msra.mxu0 %v788
        %v790 = vand.u32 %v377, 4294901760
        %791 = vmatmul.f32.gmra.mxu0 %v790
        %v792 = vpop.f32.mrf.mxu0
        %v793 = vadd.f32 %v769, %v792
        %794 = vdwg.mxu0
        %795 = vmatpush.msra.mxu0 0.0
        %796 = vmatpush.msra.mxu0 0.0
        %797 = vmatpush.msra.mxu0 0.0
        %798 = vmatpush.msra.mxu0 0.0
        %799 = vmatpush.msra.mxu0 0.0
        %800 = vmatpush.msra.mxu0 0.0
        %801 = vmatpush.msra.mxu0 0.0
        %802 = vmatpush.msra.mxu0 0.0
        %803 = vmatpush.msra.mxu0 0.0
        %804 = vmatpush.msra.mxu0 0.0
        %805 = vmatpush.msra.mxu0 0.0
        %806 = vmatpush.msra.mxu0 0.0
        %807 = vmatpush.msra.mxu0 0.0
        %808 = vmatpush.msra.mxu0 0.0
        %809 = vmatpush.msra.mxu0 0.0
        %v810 = vand.u32 %v374, 4294901760
        %811 = vmatpush.msra.mxu0 %v810
        %v812 = vand.u32 %v377, 4294901760
        %813 = vmatmul.f32.gmra.mxu0 %v812
        %v814 = vpop.f32.mrf.mxu0
        %v815 = vadd.f32 %v793, %v814
        %816 = vdwg.mxu0
        %v817 = vld [vmem:[%s317] sm:$0xff]
        %v818 = vsel %vm352, %v817, 0.0
        %v819 = vsub.f32 %v818, %v523
        %v820 = vmul.f32 %v819, %v819
        %v821 = vmul.f32 %v820, %v669
        %v822 = vsel %vm375, %v821, 0.0
        %823 = vadd.xlane.f32.xlu0 %v822
        %v824 = vpop.xlane.xlu0 %823
        %v825 = vrot.slane %v824, 4
        %v826 = vadd.f32 %v824, %v825
        %v827 = vrot.slane %v826, 2
        %v828 = vadd.f32 %v826, %v827
        %v829 = vrot.slane %v828, 1
        %v830 = vadd.f32 %v828, %v829
        %s831 = vtos %v830
        %s832 = sadd.f32 %s831, 0.0
        %v833 = vld [vmem:[%s321] sm:$0xff]
        %v834 = vsel %vm352, %v833, 0.0
        %v835 = vsub.f32 %v834, %v523
        %v836 = vmul.f32 %v835, %v835
        %v837 = vmul.f32 %v836, %v669
        %v838 = vsel %vm375, %v837, 0.0
        %839 = vadd.xlane.f32.xlu0 %v838
        %v840 = vpop.xlane.xlu0 %839
        %v841 = vrot.slane %v840, 4
        %v842 = vadd.f32 %v840, %v841
        %v843 = vrot.slane %v842, 2
        %v844 = vadd.f32 %v842, %v843
        %v845 = vrot.slane %v844, 1
        %v846 = vadd.f32 %v844, %v845
        %s847 = vtos %v846
        %s848 = sadd.f32 %s832, %s847
        %v849 = vld [vmem:[%s325] sm:$0xff]
        %v850 = vsel %vm352, %v849, 0.0
        %v851 = vsub.f32 %v850, %v523
        %v852 = vmul.f32 %v851, %v851
        %v853 = vmul.f32 %v852, %v669
        %v854 = vsel %vm375, %v853, 0.0
        %855 = vadd.xlane.f32.xlu0 %v854
        %v856 = vpop.xlane.xlu0 %855
        %v857 = vrot.slane %v856, 4
        %v858 = vadd.f32 %v856, %v857
        %v859 = vrot.slane %v858, 2
        %v860 = vadd.f32 %v858, %v859
        %v861 = vrot.slane %v860, 1
        %v862 = vadd.f32 %v860, %v861
        %s863 = vtos %v862
        %s864 = sadd.f32 %s848, %s863
        %v865 = vld [vmem:[%s329] sm:$0xff]
        %v866 = vsel %vm352, %v865, 0.0
        %v867 = vsub.f32 %v866, %v523
        %v868 = vmul.f32 %v867, %v867
        %v869 = vmul.f32 %v868, %v669
        %v870 = vsel %vm375, %v869, 0.0
        %871 = vadd.xlane.f32.xlu0 %v870
        %v872 = vpop.xlane.xlu0 %871
        %v873 = vrot.slane %v872, 4
        %v874 = vadd.f32 %v872, %v873
        %v875 = vrot.slane %v874, 2
        %v876 = vadd.f32 %v874, %v875
        %v877 = vrot.slane %v876, 1
        %v878 = vadd.f32 %v876, %v877
        %s879 = vtos %v878
        %s880 = sadd.f32 %s864, %s879
        %v881 = vsel %vm375, %v815, 0.0
        %882 = vadd.xlane.f32.xlu0 %v881
        %v883 = vpop.xlane.xlu0 %882
        %v884 = vrot.slane %v883, 4
        %v885 = vadd.f32 %v883, %v884
        %v886 = vrot.slane %v885, 2
        %v887 = vadd.f32 %v885, %v886
        %v888 = vrot.slane %v887, 1
        %v889 = vadd.f32 %v887, %v888
        %s890 = vtos %v889
        %s891 = sld [smem:[#allocation2]]
        %s892 = sadd.f32 %s891, %s880
        %s893 = scalar_lea.smem [#allocation2], 0
        %894 = sst [smem:[%s893]] %s892
        %s895 = sld [smem:[#allocation2 + $0x1]]
        %s896 = sadd.f32 %s895, %s890
        %s897 = scalar_lea.smem [#allocation2], 1
        %898 = sst [smem:[%s897]] %s896
        %p899 = scmp.eq.s32.totalorder %s19, 2
        // Predicated region
        $region53: #{tpu_custom_call.1} parent=47 // pred_check
          %p900 = pneg %p899
        $region54: #{tpu_custom_call.1} parent=47 // pred_check_branch
          %902 = sbr.rel (%p900) target = $region56
        $region55: #{tpu_custom_call.1} parent=47 // pred_region
          %s903 = sld [smem:[#allocation2]]
          %s904 = smul.f32 %s903, 0.0125
          %s905 = sld [smem:[#allocation2 + $0x1]]
          %s906 = smul.f32 %s905, 0.05
          %s907 = sadd.f32 %s904, %s906
          %s908 = smul.f32 %s907, 0.5
          %s909 = scalar_lea.smem [#allocation3], 0
          %910 = sst [smem:[%s909]] %s908
        $region56: #{tpu_custom_call.1} parent=47 // pred_fallthru
          _
        // Predicated region
        $region57: #{tpu_custom_call.1} parent=47 // pred_check
          %p911 = pneg %p204
        $region58: #{tpu_custom_call.1} parent=47 // pred_check_branch
          %913 = sbr.rel (%p911) target = $region60
        $region59: #{tpu_custom_call.1} parent=47 // pred_region
          %915 = vsyncadd [#allocation4], 0
          %s917 = sshll.u32 %s7, 4
          %s918 = int_to_ptr.hbm [resolvable:$true] %s917
          %920 = dma.smem_to_hbm [#allocation3], 16, %s918, [#allocation4]
        $region60: #{tpu_custom_call.1} parent=47 // pred_fallthru
          _
        // Predicated region
        $region61: #{tpu_custom_call.1} parent=47 // pred_check
          %p921 = pneg %p204
        $region62: #{tpu_custom_call.1} parent=47 // pred_check_branch
          %923 = sbr.rel (%p921) target = $region64
        $region63: #{tpu_custom_call.1} parent=47 // pred_region
          %925 = dma.done [#allocation4], 16
        $region64: #{tpu_custom_call.1} parent=47 // pred_fallthru
          _
        %926 = sfence
      $region48: #{tpu_custom_call.1} parent=5 // pred_fallthru
        _
      %p927 = scmp.le.s32.totalorder 2, %s14
      // Predicated region
      $region65: #{tpu_custom_call.1} parent=5 // pred_check
        %p928 = pneg %p927
      $region66: #{tpu_custom_call.1} parent=5 // pred_check_branch
        %930 = sbr.rel (%p928) target = $region68
      $region67: #{tpu_custom_call.1} parent=5 // pred_region
        %s931 = ssub.s32 %s14, 2
      $region68: #{tpu_custom_call.1} parent=5 // pred_fallthru
        _
    $region6: #{tpu_custom_call.1} parent=1 // loop_footer
      %s18 = sadd.s32 1, %s14
    $region7: #{tpu_custom_call.1} parent=1 // loop_footer_branch
      %13 = sbr.rel target = $region3
    $region8: #{tpu_custom_call.1} parent=1 // loop_exit
      _
    %932 = vsyncpa [#allocation4], 1
    %s933 = scalar_lea.sflag [#allocation4], 1
    %934 = vsyncpa %s933, 1

</llo_original>
